<compile_context>
chip_gen: v5e
topology: v5e:2x2
jax: 0.10.0
libtpu: 0.0.40
codegen_flags: <defaults>
</compile_context>

<pallas_src>
import numpy as np
import jax
import jax.numpy as jnp
from jax.experimental import pallas as pl
from jax.experimental.pallas import tpu as pltpu


def _interp_matrix(n_in, n_out):
    """(n_out, n_in) bilinear interpolation weights, align_corners=True (host-side numpy)."""
    if n_out == 1:
        src = np.zeros((1,), np.float32)
    else:
        src = np.arange(n_out, dtype=np.float32) * (n_in - 1) / (n_out - 1)
    i0 = np.clip(np.floor(src).astype(np.int32), 0, n_in - 1)
    i1 = np.clip(i0 + 1, 0, n_in - 1)
    frac = (src - i0.astype(np.float32)).astype(np.float32)
    m = np.zeros((n_out, n_in), np.float32)
    rows = np.arange(n_out)
    m[rows, i0] += 1.0 - frac
    m[rows, i1] += frac
    return m


def _choose_nb(n, per_image_io_bytes, target_step_bytes=2 << 20):
    """Images per grid step: amortize per-step overhead, keep the double-buffered
    in+out working set around target_step_bytes, and keep >= 2 grid steps when
    possible so both v7x TensorCores get work."""
    cap = max(1, target_step_bytes // max(2 * per_image_io_bytes, 1))
    cap = int(min(cap, n))
    if n >= 2:
        cap = min(cap, n // 2)
    nb = 1
    for d in range(1, cap + 1):
        if n % d == 0:
            nb = d
    return nb


def _pam_upsample_kernel(x_ref, uwt_ref, uh_ref, w_ref, o_ref):
    # x_ref:   (Nb, Cin*H, W)     Nb batch elements, NCHW with (C,H) folded (free host reshape)
    # uwt_ref: (W, W2)            width upsample operator, transposed
    # uh_ref:  (H2, H)            height upsample operator
    # w_ref:   (Cout, Cin)        1x1 conv weight
    # o_ref:   (Nb, Cout, H2*W2)  lane-dense flattened output
    nb, cin_h, w_in = x_ref.shape
    h2, h = uh_ref.shape
    w2 = uwt_ref.shape[1]
    cout, cin = w_ref.shape
    cdt = x_ref.dtype  # MXU operand dtype (f32 or bf16); accumulation is always f32

    # --- width pass: ONE 2D MXU matmul (batch+channels+rows folded into M) ---
    xf = x_ref[...].reshape(nb * cin_h, w_in)                               # (Nb*Cin*H, W)
    a = jnp.dot(xf, uwt_ref[...], preferred_element_type=jnp.float32)       # (Nb*Cin*H, W2)
    a = a.astype(cdt)

    # --- height pass: ONE 2D MXU matmul (batch*channels folded into lane/N dim) ---
    a = a.reshape(nb * cin, h, w2)
    at = jnp.transpose(a, (1, 0, 2)).reshape(h, nb * cin * w2)              # (H, Nb*Cin*W2)
    b = jnp.dot(uh_ref[...], at, preferred_element_type=jnp.float32)        # (H2, Nb*Cin*W2)
    b = b.astype(cdt).reshape(h2, nb, cin, w2)

    # --- 1x1 conv (no bias) + ReLU on the lane-dense flattened spatial axis ---
    # Nb is a small static int: unrolled loop; each iteration is one matmul whose
    # lane (N) dimension is the full H2*W2, so MXU occupancy stays high.
    for n in range(nb):
        bn = jnp.transpose(b[:, n], (1, 0, 2)).reshape(cin, h2 * w2)        # (Cin, H2*W2)
        y = jnp.dot(w_ref[...], bn, preferred_element_type=jnp.float32)     # (Cout, H2*W2)
        o_ref[n] = jnp.maximum(y, 0.0).astype(o_ref.dtype)


def pam_upsampler(x_nchw, conv_w, scale=2, use_bf16=False, nb=None):
    """x_nchw: (N, Cin, H, W); conv_w: (Cout, Cin, 1, 1) -> (N, Cout, scale*H, scale*W).

    Bilinear x`scale` upsample (align_corners=True) -> 1x1 conv (no bias) -> ReLU,
    fused into one Pallas TPU kernel. use_bf16=True feeds the MXU bf16 operands
    (f32 accumulation) -- the fast path on v6e/v7x.
    """
    N, Cin, H, W = x_nchw.shape
    Cout = conv_w.shape[0]
    H2, W2 = H * scale, W * scale

    cdt = jnp.bfloat16 if use_bf16 else x_nchw.dtype
    uh = jnp.asarray(_interp_matrix(H, H2)).astype(cdt)           # (H2, H)
    uwt = jnp.asarray(_interp_matrix(W, W2).T).astype(cdt)        # (W, W2)
    w_mat = conv_w.reshape(Cout, Cin).astype(cdt)                 # (Cout, Cin)
    # Free contiguous reshape (fold C,H) so the kernel's width pass is a single 2D dot.
    x_folded = x_nchw.astype(cdt).reshape(N, Cin * H, W)

    esz = jnp.dtype(cdt).itemsize
    per_image_io = (Cin * H * W + Cout * H2 * W2) * esz
    if nb is None:
        nb = _choose_nb(N, per_image_io)
    assert N % nb == 0, (N, nb)
    grid = (N // nb,)

    # VMEM budget: double-buffered in/out + weights + f32 intermediates, with headroom,
    # clamped to 64 MiB so the same limit is valid on v7x as well as v5e/v6e.
    step_bytes = (2 * nb * per_image_io
                  + 2 * (H2 * H + W * W2 + Cout * Cin) * esz
                  + nb * Cin * (H * W2 + H2 * W2) * (4 + esz))
    vmem_limit = int(min(max(32 << 20, 4 * step_bytes), 64 << 20))

    out_flat = pl.pallas_call(
        _pam_upsample_kernel,
        out_shape=jax.ShapeDtypeStruct((N, Cout, H2 * W2), cdt),
        grid=grid,
        in_specs=[
            pl.BlockSpec((nb, Cin * H, W), lambda i: (i, 0, 0)),
            pl.BlockSpec((W, W2), lambda i: (0, 0)),
            pl.BlockSpec((H2, H), lambda i: (0, 0)),
            pl.BlockSpec((Cout, Cin), lambda i: (0, 0)),
        ],
        out_specs=pl.BlockSpec((nb, Cout, H2 * W2), lambda i: (i, 0, 0)),
        compiler_params=pltpu.CompilerParams(
            dimension_semantics=("parallel",),
            vmem_limit_bytes=vmem_limit),
    )(x_folded, uwt, uh, w_mat)

    # free reshape back to NCHW (no transpose needed)
    return out_flat.reshape(N, Cout, H2, W2)


if __name__ == "__main__":
    N, Cin, H, W = 2, 4, 16, 16
    Cout, scale = 8, 2

    key = jax.random.PRNGKey(0)
    kx, kw = jax.random.split(key)
    x = jax.random.normal(kx, (N, Cin, H, W), dtype=jnp.float32)
    # deterministic kaiming-style init for the 1x1 conv weight (fan_in = Cin)
    conv_w = jax.random.normal(kw, (Cout, Cin, 1, 1), dtype=jnp.float32) * jnp.sqrt(2.0 / Cin)

    out = jax.block_until_ready(pam_upsampler(x, conv_w, scale=scale))

    # pure-JAX reference with the same align_corners=True semantics
    uh = jnp.asarray(_interp_matrix(H, H * scale))
    uw = jnp.asarray(_interp_matrix(W, W * scale))
    up_ref = jnp.einsum("uh,vw,nchw->ncuv", uh, uw, x)
    ref = jnp.maximum(jnp.einsum("ncuv,oc->nouv", up_ref, conv_w.reshape(Cout, Cin)), 0.0)

    assert out.shape == (N, Cout, H * scale, W * scale), out.shape
    assert jnp.allclose(out, ref, atol=1e-4, rtol=1e-4), float(jnp.max(jnp.abs(out - ref)))

    # independent golden: bilinear align_corners=True reproduces a linear ramp exactly,
    # matching F.interpolate semantics: out[u] = u*(H-1)/(2H-1).
    x_ramp = jnp.broadcast_to(
        jnp.arange(H, dtype=jnp.float32)[None, None, :, None], (1, Cin, H, W))
    w_pick = jnp.zeros((Cout, Cin, 1, 1), jnp.float32).at[0, 0, 0, 0].set(1.0)
    out_ramp = jax.block_until_ready(pam_upsampler(x_ramp, w_pick, scale=scale))
    expect = jnp.arange(H * scale, dtype=jnp.float32) * (H - 1) / (H * scale - 1)
    assert jnp.allclose(out_ramp[0, 0, :, 0], expect, atol=1e-4, rtol=1e-4), (
        float(jnp.max(jnp.abs(out_ramp[0, 0, :, 0] - expect))))

    # bf16 operand path (v6e/v7x fast path): loose tolerance, f32 accumulation in-kernel
    out_bf16 = jax.block_until_ready(pam_upsampler(x, conv_w, scale=scale, use_bf16=True))
    assert out_bf16.dtype == jnp.bfloat16, out_bf16.dtype
    assert jnp.allclose(out_bf16.astype(jnp.float32), ref, atol=1e-1, rtol=1e-1), (
        float(jnp.max(jnp.abs(out_bf16.astype(jnp.float32) - ref))))

    print("KERNEL_OK")
</pallas_src>

<mosaic_0001>
module attributes {stable_mosaic.version = 11 : i64} {
  func.func @_pam_upsample_kernel(%arg0: i32, %arg1: memref<1x64x16xf32, #tpu.memory_space<vmem>>, %arg2: memref<16x32xf32, #tpu.memory_space<vmem>>, %arg3: memref<32x16xf32, #tpu.memory_space<vmem>>, %arg4: memref<8x4xf32, #tpu.memory_space<vmem>>, %arg5: memref<1x8x1024xf32, #tpu.memory_space<vmem>>) attributes {dimension_semantics = [#tpu.dimension_semantics<parallel>], iteration_bounds = array<i64: 2>, scalar_prefetch = 0 : i64, scratch_operands = 0 : i64, tpu.core_type = #tpu.core_type<tc>, window_params = [{transform_indices = @transform_0, window_bounds = array<i64: 1, 64, 16>}, {pipeline_mode = #tpu.pipeline_mode<synchronous>, transform_indices = @transform_1, window_bounds = array<i64: 16, 32>}, {pipeline_mode = #tpu.pipeline_mode<synchronous>, transform_indices = @transform_2, window_bounds = array<i64: 32, 16>}, {pipeline_mode = #tpu.pipeline_mode<synchronous>, transform_indices = @transform_3, window_bounds = array<i64: 8, 4>}, {transform_indices = @transform_4, window_bounds = array<i64: 1, 8, 1024>}]} {
    %c0 = arith.constant 0 : index
    %c0_0 = arith.constant 0 : index
    %c0_1 = arith.constant 0 : index
    %0 = vector.load %arg1[%c0, %c0_0, %c0_1] : memref<1x64x16xf32, #tpu.memory_space<vmem>>, vector<1x64x16xf32>
    %1 = vector.shape_cast %0 : vector<1x64x16xf32> to vector<64x16xf32>
    %c0_2 = arith.constant 0 : index
    %c0_3 = arith.constant 0 : index
    %2 = vector.load %arg2[%c0_2, %c0_3] : memref<16x32xf32, #tpu.memory_space<vmem>>, vector<16x32xf32>
    %cst = arith.constant dense<0.000000e+00> : vector<64x32xf32>
    %3 = tpu.matmul %1, %2, %cst {dimension_numbers = #tpu.dot_dimension_numbers<[1], [0], [0], [1], [0, 0, 1, 1], [], []>} : vector<64x16xf32>, vector<16x32xf32>, vector<64x32xf32> -> vector<64x32xf32>
    %4 = vector.shape_cast %3 : vector<64x32xf32> to vector<4x16x32xf32>
    %5 = tpu.transpose %4, [1, 0, 2] : vector<4x16x32xf32> -> vector<16x4x32xf32>
    %6 = vector.shape_cast %5 : vector<16x4x32xf32> to vector<16x128xf32>
    %c0_4 = arith.constant 0 : index
    %c0_5 = arith.constant 0 : index
    %7 = vector.load %arg3[%c0_4, %c0_5] : memref<32x16xf32, #tpu.memory_space<vmem>>, vector<32x16xf32>
    %cst_6 = arith.constant dense<0.000000e+00> : vector<32x128xf32>
    %8 = tpu.matmul %7, %6, %cst_6 {dimension_numbers = #tpu.dot_dimension_numbers<[1], [0], [0], [1], [0, 0, 1, 1], [], []>} : vector<32x16xf32>, vector<16x128xf32>, vector<32x128xf32> -> vector<32x128xf32>
    %9 = vector.shape_cast %8 : vector<32x128xf32> to vector<32x1x4x32xf32>
    %10 = vector.shape_cast %9 : vector<32x1x4x32xf32> to vector<32x4x32xf32>
    %11 = tpu.transpose %10, [1, 0, 2] : vector<32x4x32xf32> -> vector<4x32x32xf32>
    %12 = vector.shape_cast %11 : vector<4x32x32xf32> to vector<4x1024xf32>
    %c0_7 = arith.constant 0 : index
    %c0_8 = arith.constant 0 : index
    %13 = vector.load %arg4[%c0_7, %c0_8] : memref<8x4xf32, #tpu.memory_space<vmem>>, vector<8x4xf32>
    %cst_9 = arith.constant dense<0.000000e+00> : vector<8x1024xf32>
    %14 = tpu.matmul %13, %12, %cst_9 {dimension_numbers = #tpu.dot_dimension_numbers<[1], [0], [0], [1], [0, 0, 1, 1], [], []>} : vector<8x4xf32>, vector<4x1024xf32>, vector<8x1024xf32> -> vector<8x1024xf32>
    %cst_10 = arith.constant 0.000000e+00 : f32
    %15 = vector.broadcast %cst_10 : f32 to vector<8x1024xf32>
    %16 = arith.maximumf %14, %15 : vector<8x1024xf32>
    %c0_11 = arith.constant 0 : index
    %c0_12 = arith.constant 0 : index
    %c0_13 = arith.constant 0 : index
    %17 = vector.load %arg5[%c0_11, %c0_12, %c0_13] : memref<1x8x1024xf32, #tpu.memory_space<vmem>>, vector<1x8x1024xf32>
    %18 = vector.shape_cast %17 : vector<1x8x1024xf32> to vector<8x1024xf32>
    %19 = vector.shape_cast %16 : vector<8x1024xf32> to vector<1x8x1024xf32>
    tpu.vector_store %arg5[%c0_11, %c0_12, %c0_13], %19 {strides = array<i32>} : memref<1x8x1024xf32, #tpu.memory_space<vmem>>, vector<1x8x1024xf32>,
    return
  }
  func.func @transform_0(%arg0: i32) -> (i32, i32, i32) {
    %c0_i32 = arith.constant 0 : i32
    %c0_i32_0 = arith.constant 0 : i32
    %c0_i32_1 = arith.constant 0 : i32
    return %arg0, %c0_i32, %c0_i32_0 : i32, i32, i32
  }
  func.func @transform_1(%arg0: i32) -> (i32, i32) {
    %c0_i32 = arith.constant 0 : i32
    %c0_i32_0 = arith.constant 0 : i32
    %c0_i32_1 = arith.constant 0 : i32
    return %c0_i32, %c0_i32_0 : i32, i32
  }
  func.func @transform_2(%arg0: i32) -> (i32, i32) {
    %c0_i32 = arith.constant 0 : i32
    %c0_i32_0 = arith.constant 0 : i32
    %c0_i32_1 = arith.constant 0 : i32
    return %c0_i32, %c0_i32_0 : i32, i32
  }
  func.func @transform_3(%arg0: i32) -> (i32, i32) {
    %c0_i32 = arith.constant 0 : i32
    %c0_i32_0 = arith.constant 0 : i32
    %c0_i32_1 = arith.constant 0 : i32
    return %c0_i32, %c0_i32_0 : i32, i32
  }
  func.func @transform_4(%arg0: i32) -> (i32, i32, i32) {
    %c0_i32 = arith.constant 0 : i32
    %c0_i32_0 = arith.constant 0 : i32
    %c0_i32_1 = arith.constant 0 : i32
    return %arg0, %c0_i32, %c0_i32_0 : i32, i32, i32
  }
}

</mosaic_0001>

<llo_original>
// kernel: tpu_custom_call.1
$region0: #{tpu_custom_call.1}
  #allocation0 [shape = 'u32[]', space=smem, size = 0x4, offset = 0x4, fixed_abs, tag = 'smem constant byte address 0x4 - core index']
  #allocation1 [shape = 'u32[72,128]{1,0:T(1,128)}', space=vmem, size = 0x9000, scoped, tag = 'internal scratch']
  %s0 = inlined_call_operand.vmem [shape: f32[2,64,16], index: 0, kind: input, shape index: {}]
  %s1 = inlined_call_operand.vmem [shape: f32[16,32], index: 1, kind: input, shape index: {}]
  %s2 = inlined_call_operand.vmem [shape: f32[32,16], index: 2, kind: input, shape index: {}]
  %s3 = inlined_call_operand.vmem [shape: f32[8,4], index: 3, kind: input, shape index: {}]
  %s4 = inlined_call_operand.hbm [shape: f32[2,8,1024], index: 4, kind: output, shape index: {}]
  %s5 = sld [smem:[#allocation0]]
  $region49: #{tpu_custom_call.1} parent=0
    _
  %s7 = ssub.s32 1, %s5
  %s8 = scalar_select 0, %s7, %s5
  $region1: #{tpu_custom_call.1} parent=0
    #allocation2 [shape = 'u8[65536]{0}', space=vmem, size = 0x10000, scoped, tag = 'output window, operand 0']
    #allocation3 [shape = 's32[2]{0}', space=sflag, size = 0x8, scoped, tag = 'scoped memory for tpu_custom_call.1']
    %9 = vsyncpa [#allocation3], 0
    %s10 = scalar_lea.sflag [#allocation3], 1
    %11 = vsyncpa %s10, 0
    loop: start=0, step=1, limit=4
    $region2: #{tpu_custom_call.1} parent=1 // loop_pre_header
      _
    $region3: #{tpu_custom_call.1} parent=1 // loop_header
      %s13 = sphi 0, %s17
      %p14 = scmp.ge.s32.totalorder %s13, 4
      %s23 = sphi 0, %s25
      %s26 = sphi 0, %s23
      %s27 = sphi 0, %s26
      %s43 = sphi 0, %s27
      %s47 = sphi 0, %s47
      %s49 = sphi 0, %s47
      %s50 = sphi 0, %s49
      %s64 = sphi 0, %s50
      %s68 = sphi 0, %s68
      %s70 = sphi 0, %s68
      %s71 = sphi 0, %s70
      %s85 = sphi 0, %s71
      %s89 = sphi 0, %s89
      %s91 = sphi 0, %s89
      %s92 = sphi 0, %s91
      %s106 = sphi 0, %s92
      %s112 = sphi 0, %s114
      %s115 = sphi 0, %s112
      %s116 = sphi 0, %s115
      %s132 = sphi 0, %s116
    $region4: #{tpu_custom_call.1} parent=1 // loop_header_branch
      %16 = sbr.rel (%p14) target = $region8
    $region5: #{tpu_custom_call.1} parent=1 // loop_body
      %s18 = ssub.s32 %s13, 1
      %s19 = ssub.s32 %s13, 2
      %s20 = sadd.s32 %s13, 1
      %s21 = ssub.s32 %s13, %s20
      %p22 = scmp.eq.s32.totalorder %s21, 0
      %s24 = sadd.s32 %s23, 1
      %s25 = scalar_select %p22, %s23, %s24
      %p28 = pneg %p22
      %p29 = scmp.eq.s32.totalorder %s13, 1
      %p30 = por %p28, %p29
      %p31 = scmp.ne.s32.totalorder %s23, %s26
      %p32 = scmp.eq.s32.totalorder %s13, 0
      %p33 = por %p31, %p32
      %p34 = scmp.ne.s32.totalorder %s23, %s26
      %p35 = scmp.eq.s32.totalorder %s18, 1
      %p36 = por %p34, %p35
      %p37 = scmp.ne.s32.totalorder %s26, %s27
      %p38 = scmp.eq.s32.totalorder %s18, 0
      %p39 = por %p37, %p38
      %p40 = scmp.ne.s32.totalorder %s26, %s27
      %p41 = scmp.eq.s32.totalorder %s19, 1
      %p42 = por %p40, %p41
      %p44 = scmp.ne.s32.totalorder %s27, %s43
      %p45 = scmp.eq.s32.totalorder %s19, 0
      %p46 = por %p44, %p45
      %s48 = sadd.s32 %s47, 1
      %p51 = scmp.eq.s32.totalorder %s13, 1
      %p52 = scmp.ne.s32.totalorder %s47, %s49
      %p53 = scmp.eq.s32.totalorder %s13, 0
      %p54 = por %p52, %p53
      %p55 = scmp.ne.s32.totalorder %s47, %s49
      %p56 = scmp.eq.s32.totalorder %s18, 1
      %p57 = por %p55, %p56
      %p58 = scmp.ne.s32.totalorder %s49, %s50
      %p59 = scmp.eq.s32.totalorder %s18, 0
      %p60 = por %p58, %p59
      %p61 = scmp.ne.s32.totalorder %s49, %s50
      %p62 = scmp.eq.s32.totalorder %s19, 1
      %p63 = por %p61, %p62
      %p65 = scmp.ne.s32.totalorder %s50, %s64
      %p66 = scmp.eq.s32.totalorder %s19, 0
      %p67 = por %p65, %p66
      %s69 = sadd.s32 %s68, 1
      %p72 = scmp.eq.s32.totalorder %s13, 1
      %p73 = scmp.ne.s32.totalorder %s68, %s70
      %p74 = scmp.eq.s32.totalorder %s13, 0
      %p75 = por %p73, %p74
      %p76 = scmp.ne.s32.totalorder %s68, %s70
      %p77 = scmp.eq.s32.totalorder %s18, 1
      %p78 = por %p76, %p77
      %p79 = scmp.ne.s32.totalorder %s70, %s71
      %p80 = scmp.eq.s32.totalorder %s18, 0
      %p81 = por %p79, %p80
      %p82 = scmp.ne.s32.totalorder %s70, %s71
      %p83 = scmp.eq.s32.totalorder %s19, 1
      %p84 = por %p82, %p83
      %p86 = scmp.ne.s32.totalorder %s71, %s85
      %p87 = scmp.eq.s32.totalorder %s19, 0
      %p88 = por %p86, %p87
      %s90 = sadd.s32 %s89, 1
      %p93 = scmp.eq.s32.totalorder %s13, 1
      %p94 = scmp.ne.s32.totalorder %s89, %s91
      %p95 = scmp.eq.s32.totalorder %s13, 0
      %p96 = por %p94, %p95
      %p97 = scmp.ne.s32.totalorder %s89, %s91
      %p98 = scmp.eq.s32.totalorder %s18, 1
      %p99 = por %p97, %p98
      %p100 = scmp.ne.s32.totalorder %s91, %s92
      %p101 = scmp.eq.s32.totalorder %s18, 0
      %p102 = por %p100, %p101
      %p103 = scmp.ne.s32.totalorder %s91, %s92
      %p104 = scmp.eq.s32.totalorder %s19, 1
      %p105 = por %p103, %p104
      %p107 = scmp.ne.s32.totalorder %s92, %s106
      %p108 = scmp.eq.s32.totalorder %s19, 0
      %p109 = por %p107, %p108
      %s110 = ssub.s32 %s13, %s20
      %p111 = scmp.eq.s32.totalorder %s110, 0
      %s113 = sadd.s32 %s112, 1
      %s114 = scalar_select %p111, %s112, %s113
      %p117 = pneg %p111
      %p118 = scmp.eq.s32.totalorder %s13, 1
      %p119 = por %p117, %p118
      %p120 = scmp.ne.s32.totalorder %s112, %s115
      %p121 = scmp.eq.s32.totalorder %s13, 0
      %p122 = por %p120, %p121
      %p123 = scmp.ne.s32.totalorder %s112, %s115
      %p124 = scmp.eq.s32.totalorder %s18, 1
      %p125 = por %p123, %p124
      %p126 = scmp.ne.s32.totalorder %s115, %s116
      %p127 = scmp.eq.s32.totalorder %s18, 0
      %p128 = por %p126, %p127
      %p129 = scmp.ne.s32.totalorder %s115, %s116
      %p130 = scmp.eq.s32.totalorder %s19, 1
      %p131 = por %p129, %p130
      %p133 = scmp.ne.s32.totalorder %s116, %s132
      %p134 = scmp.eq.s32.totalorder %s19, 0
      %p135 = por %p133, %p134
      %p136 = scmp.le.s32.totalorder 1, %s13
      %p137 = scmp.lt.s32.totalorder %s13, 3
      %p138 = pnand %p136, %p137
      %p139 = pneg %p138
      // Predicated region
      $region9: #{tpu_custom_call.1} parent=5 // pred_check
        _
      $region10: #{tpu_custom_call.1} parent=5 // pred_check_branch
        %141 = sbr.rel (%p138) target = $region12
      $region11: #{tpu_custom_call.1} parent=5 // pred_region
        %s142 = ssub.s32 %s13, 1
        // Predicated region
        $region13: #{tpu_custom_call.1} parent=11 // pred_check
          %p143 = pneg %p60
        $region14: #{tpu_custom_call.1} parent=11 // pred_check_branch
          %145 = sbr.rel (%p143) target = $region16
        $region15: #{tpu_custom_call.1} parent=11 // pred_region
          _
        $region16: #{tpu_custom_call.1} parent=11 // pred_fallthru
          _
        // Predicated region
        $region17: #{tpu_custom_call.1} parent=11 // pred_check
          %p146 = pneg %p81
        $region18: #{tpu_custom_call.1} parent=11 // pred_check_branch
          %148 = sbr.rel (%p146) target = $region20
        $region19: #{tpu_custom_call.1} parent=11 // pred_region
          _
        $region20: #{tpu_custom_call.1} parent=11 // pred_fallthru
          _
        // Predicated region
        $region21: #{tpu_custom_call.1} parent=11 // pred_check
          %p149 = pneg %p102
        $region22: #{tpu_custom_call.1} parent=11 // pred_check_branch
          %151 = sbr.rel (%p149) target = $region24
        $region23: #{tpu_custom_call.1} parent=11 // pred_region
          _
        $region24: #{tpu_custom_call.1} parent=11 // pred_fallthru
          _
      $region12: #{tpu_custom_call.1} parent=5 // pred_fallthru
        _
      %p152 = scmp.lt.s32.totalorder %s13, 2
      // Predicated region
      $region25: #{tpu_custom_call.1} parent=5 // pred_check
        %p153 = pneg %p152
      $region26: #{tpu_custom_call.1} parent=5 // pred_check_branch
        %155 = sbr.rel (%p153) target = $region28
      $region27: #{tpu_custom_call.1} parent=5 // pred_region
        // Predicated region
        $region29: #{tpu_custom_call.1} parent=27 // pred_check
          %p156 = pneg %p33
        $region30: #{tpu_custom_call.1} parent=27 // pred_check_branch
          %158 = sbr.rel (%p156) target = $region32
        $region31: #{tpu_custom_call.1} parent=27 // pred_region
          %p159 = scmp.lt.s32.totalorder %s13, 1
          %s160 = scalar_select %p159, %s13, 1
          %s161 = smul.addr %s160, 8
          %s162 = smul.addr %s161, 8
          %s163 = scalar_lea.vmem %s0, %s162
        $region32: #{tpu_custom_call.1} parent=27 // pred_fallthru
          _
      $region28: #{tpu_custom_call.1} parent=5 // pred_fallthru
        _
      %p164 = scmp.le.s32.totalorder 1, %s13
      %p165 = scmp.lt.s32.totalorder %s13, 3
      %p166 = pnand %p164, %p165
      %p167 = pneg %p166
      // Predicated region
      $region33: #{tpu_custom_call.1} parent=5 // pred_check
        _
      $region34: #{tpu_custom_call.1} parent=5 // pred_check_branch
        %169 = sbr.rel (%p166) target = $region36
      $region35: #{tpu_custom_call.1} parent=5 // pred_region
        %s170 = ssub.s32 %s13, 1
        %p171 = scmp.lt.s32.totalorder %s18, 1
        %s172 = scalar_select %p171, %s18, 1
        %s173 = smul.addr %s172, 8
        %s174 = smul.addr %s173, 8
        %s175 = scalar_lea.vmem %s0, %s174
        %p176 = pneg %p39
        %p177 = pneg %p36
        %p178 = pneg %p60
        %p179 = pneg %p57
        %p180 = pneg %p81
        %p181 = pneg %p78
        %p182 = pneg %p102
        %p183 = pneg %p99
        %p184 = pneg %p128
        %p185 = pneg %p125
        %s186 = sand.u32 %s115, 1
        %s187 = scalar_lea.sflag [#allocation3], %s186
        %s188 = sand.u32 %s115, 1
        %s189 = smul.addr %s188, 64
        %s190 = scalar_lea.vmem [#allocation2], %s189
        %p191 = scmp.lt.s32.totalorder %s18, 1
        %s192 = scalar_select %p191, %s18, 1
        %s193 = smul.addr %s192, 8
        %s194 = smul.addr %s193, 8
        %s195 = scalar_lea.vmem %s0, %s194
        %v196 = vld [vmem:[%s195] sm:$0xff]
        %v197 = vld [vmem:[%s195 + $0x8] sm:$0xff]
        %v198 = vld [vmem:[%s195 + $0x10] sm:$0xff]
        %v199 = vld [vmem:[%s195 + $0x18] sm:$0xff]
        %v200 = vld [vmem:[%s195 + $0x20] sm:$0xff]
        %v201 = vld [vmem:[%s195 + $0x28] sm:$0xff]
        %v202 = vld [vmem:[%s195 + $0x30] sm:$0xff]
        %v203 = vld [vmem:[%s195 + $0x38] sm:$0xff]
        %v204 = vld [vmem:[%s1] sm:$0xff]
        %v205 = vld [vmem:[%s1 + $0x8] sm:$0xff]
        %vm206 = vcmask 130048
        %v208 = vsel %vm206, %v196, 0
        %v211 = vsel %vm206, %v197, 0
        %v214 = vsel %vm206, %v198, 0
        %v217 = vsel %vm206, %v199, 0
        %v220 = vsel %vm206, %v200, 0
        %v223 = vsel %vm206, %v201, 0
        %v226 = vsel %vm206, %v202, 0
        %v229 = vsel %vm206, %v203, 0
        %231 = vmatpush.msra.mxu0 0.0
        %232 = vmatpush.msra.mxu0 0.0
        %233 = vmatpush.msra.mxu0 0.0
        %234 = vmatpush.msra.mxu0 0.0
        %235 = vmatpush.msra.mxu0 0.0
        %236 = vmatpush.msra.mxu0 0.0
        %237 = vmatpush.msra.mxu0 0.0
        %238 = vmatpush.msra.mxu0 0.0
        %239 = vmatpush.msra.mxu0 0.0
        %240 = vmatpush.msra.mxu0 0.0
        %241 = vmatpush.msra.mxu0 0.0
        %242 = vmatpush.msra.mxu0 0.0
        %243 = vmatpush.msra.mxu0 0.0
        %244 = vmatpush.msra.mxu0 0.0
        %245 = vmatpush.msra.mxu0 %v205
        %246 = vmatpush.msra.mxu0 %v204
        %247 = vmatmul.f32.gmra.mxu0 %v208
        %v248 = vpop.f32.mrf.mxu0
        %v249 = vadd.f32 0.0, %v248
        %250 = vmatmul.f32.gmra.mxu0 %v211
        %v251 = vpop.f32.mrf.mxu0
        %v252 = vadd.f32 0.0, %v251
        %253 = vmatmul.f32.gmra.mxu0 %v214
        %v254 = vpop.f32.mrf.mxu0
        %v255 = vadd.f32 0.0, %v254
        %256 = vmatmul.f32.gmra.mxu0 %v217
        %v257 = vpop.f32.mrf.mxu0
        %v258 = vadd.f32 0.0, %v257
        %259 = vmatmul.f32.gmra.mxu0 %v220
        %v260 = vpop.f32.mrf.mxu0
        %v261 = vadd.f32 0.0, %v260
        %262 = vmatmul.f32.gmra.mxu0 %v223
        %v263 = vpop.f32.mrf.mxu0
        %v264 = vadd.f32 0.0, %v263
        %265 = vmatmul.f32.gmra.mxu0 %v226
        %v266 = vpop.f32.mrf.mxu0
        %v267 = vadd.f32 0.0, %v266
        %268 = vmatmul.f32.gmra.mxu0 %v229
        %v269 = vpop.f32.mrf.mxu0
        %v270 = vadd.f32 0.0, %v269
        %271 = vdwg.mxu0
        %v272 = vrot.slane %v261, 4
        %vm273 = vcmask 1047556
        %v274 = vsel %vm273, %v272, %v249
        %v275 = vrot.slane %v249, 4
        %v276 = vsel %vm273, %v261, %v275
        %v278 = vunpack.c.l.s4 1983009808
        %v279 = vunpack.c.0.s8 %v278
        %v280 = vperm.slane %v274, %v279
        %v282 = vunpack.c.l.s4 1983009808
        %v283 = vunpack.c.0.s8 %v282
        %v284 = vperm.slane %v276, %v283
        %v285 = vrot.slane %v267, 4
        %v286 = vsel %vm273, %v285, %v255
        %v287 = vrot.slane %v255, 4
        %v288 = vsel %vm273, %v267, %v287
        %v290 = vunpack.c.l.s4 1983009808
        %v291 = vunpack.c.0.s8 %v290
        %v292 = vperm.slane %v286, %v291
        %v294 = vunpack.c.l.s4 1983009808
        %v295 = vunpack.c.0.s8 %v294
        %v296 = vperm.slane %v288, %v295
        %v297 = vrot.slane %v292, 4
        %v298 = vsel %vm273, %v297, %v280
        %v299 = vrot.slane %v280, 4
        %v300 = vsel %vm273, %v292, %v299
        %v302 = vunpack.c.l.s4 1934713408
        %v303 = vunpack.c.0.s8 %v302
        %v304 = vperm.slane %v298, %v303
        %v306 = vunpack.c.l.s4 1934713408
        %v307 = vunpack.c.0.s8 %v306
        %v308 = vperm.slane %v300, %v307
        %v309 = vrot.slane %v296, 4
        %v310 = vsel %vm273, %v309, %v284
        %v311 = vrot.slane %v284, 4
        %v312 = vsel %vm273, %v296, %v311
        %v314 = vunpack.c.l.s4 1934713408
        %v315 = vunpack.c.0.s8 %v314
        %v316 = vperm.slane %v310, %v315
        %v318 = vunpack.c.l.s4 1934713408
        %v319 = vunpack.c.0.s8 %v318
        %v320 = vperm.slane %v312, %v319
        %v321 = vrot.slane %v304, 4
        %v322 = vsel %vm273, 0.0, %v321
        %v323 = vrot.slane %v308, 4
        %v324 = vsel %vm273, 0.0, %v323
        %v325 = vrot.slane %v316, 4
        %v326 = vsel %vm273, 0.0, %v325
        %v327 = vrot.slane %v320, 4
        %v328 = vsel %vm273, 0.0, %v327
        %v329 = vrot.slane %v264, 4
        %v330 = vsel %vm273, %v329, %v252
        %v331 = vrot.slane %v252, 4
        %v332 = vsel %vm273, %v264, %v331
        %v334 = vunpack.c.l.s4 1983009808
        %v335 = vunpack.c.0.s8 %v334
        %v336 = vperm.slane %v330, %v335
        %v338 = vunpack.c.l.s4 1983009808
        %v339 = vunpack.c.0.s8 %v338
        %v340 = vperm.slane %v332, %v339
        %v341 = vrot.slane %v270, 4
        %v342 = vsel %vm273, %v341, %v258
        %v343 = vrot.slane %v258, 4
        %v344 = vsel %vm273, %v270, %v343
        %v346 = vunpack.c.l.s4 1983009808
        %v347 = vunpack.c.0.s8 %v346
        %v348 = vperm.slane %v342, %v347
        %v350 = vunpack.c.l.s4 1983009808
        %v351 = vunpack.c.0.s8 %v350
        %v352 = vperm.slane %v344, %v351
        %v353 = vrot.slane %v348, 4
        %v354 = vsel %vm273, %v353, %v336
        %v355 = vrot.slane %v336, 4
        %v356 = vsel %vm273, %v348, %v355
        %v358 = vunpack.c.l.s4 1934713408
        %v359 = vunpack.c.0.s8 %v358
        %v360 = vperm.slane %v354, %v359
        %v362 = vunpack.c.l.s4 1934713408
        %v363 = vunpack.c.0.s8 %v362
        %v364 = vperm.slane %v356, %v363
        %v365 = vrot.slane %v352, 4
        %v366 = vsel %vm273, %v365, %v340
        %v367 = vrot.slane %v340, 4
        %v368 = vsel %vm273, %v352, %v367
        %v370 = vunpack.c.l.s4 1934713408
        %v371 = vunpack.c.0.s8 %v370
        %v372 = vperm.slane %v366, %v371
        %v374 = vunpack.c.l.s4 1934713408
        %v375 = vunpack.c.0.s8 %v374
        %v376 = vperm.slane %v368, %v375
        %v377 = vrot.slane %v360, 4
        %v378 = vsel %vm273, 0.0, %v377
        %v379 = vrot.slane %v364, 4
        %v380 = vsel %vm273, 0.0, %v379
        %v381 = vrot.slane %v372, 4
        %v382 = vsel %vm273, 0.0, %v381
        %v383 = vrot.slane %v376, 4
        %v384 = vsel %vm273, 0.0, %v383
        %v385 = vsel %vm273, %v323, %v304
        %v387 = vunpack.c.l.s4 1983009808
        %v388 = vunpack.c.0.s8 %v387
        %v389 = vperm.slane %v385, %v388
        %v390 = vrot.slane %v324, 4
        %v391 = vsel %vm273, %v390, %v322
        %v393 = vunpack.c.l.s4 1983009808
        %v394 = vunpack.c.0.s8 %v393
        %v395 = vperm.slane %v391, %v394
        %v396 = vsel %vm273, %v327, %v316
        %v398 = vunpack.c.l.s4 1983009808
        %v399 = vunpack.c.0.s8 %v398
        %v400 = vperm.slane %v396, %v399
        %v401 = vrot.slane %v328, 4
        %v402 = vsel %vm273, %v401, %v326
        %v404 = vunpack.c.l.s4 1983009808
        %v405 = vunpack.c.0.s8 %v404
        %v406 = vperm.slane %v402, %v405
        %v407 = vrot.slane %v395, 4
        %v408 = vsel %vm273, %v407, %v389
        %v409 = vrot.slane %v389, 4
        %v410 = vsel %vm273, %v395, %v409
        %v412 = vunpack.c.l.s4 1934713408
        %v413 = vunpack.c.0.s8 %v412
        %v414 = vperm.slane %v408, %v413
        %v416 = vunpack.c.l.s4 1934713408
        %v417 = vunpack.c.0.s8 %v416
        %v418 = vperm.slane %v410, %v417
        %v419 = vrot.slane %v406, 4
        %v420 = vsel %vm273, %v419, %v400
        %v421 = vrot.slane %v400, 4
        %v422 = vsel %vm273, %v406, %v421
        %v424 = vunpack.c.l.s4 1934713408
        %v425 = vunpack.c.0.s8 %v424
        %v426 = vperm.slane %v420, %v425
        %v428 = vunpack.c.l.s4 1934713408
        %v429 = vunpack.c.0.s8 %v428
        %v430 = vperm.slane %v422, %v429
        %v431 = vrot.slane %v426, 4
        %v432 = vsel %vm273, %v431, %v414
        %v433 = vrot.slane %v414, 4
        %v434 = vsel %vm273, %v426, %v433
        %v435 = vrot.slane %v430, 4
        %v436 = vsel %vm273, %v435, %v418
        %v437 = vrot.slane %v418, 4
        %v438 = vsel %vm273, %v430, %v437
        %v439 = vsel %vm273, %v379, %v360
        %v441 = vunpack.c.l.s4 1983009808
        %v442 = vunpack.c.0.s8 %v441
        %v443 = vperm.slane %v439, %v442
        %v444 = vrot.slane %v380, 4
        %v445 = vsel %vm273, %v444, %v378
        %v447 = vunpack.c.l.s4 1983009808
        %v448 = vunpack.c.0.s8 %v447
        %v449 = vperm.slane %v445, %v448
        %v450 = vsel %vm273, %v383, %v372
        %v452 = vunpack.c.l.s4 1983009808
        %v453 = vunpack.c.0.s8 %v452
        %v454 = vperm.slane %v450, %v453
        %v455 = vrot.slane %v384, 4
        %v456 = vsel %vm273, %v455, %v382
        %v458 = vunpack.c.l.s4 1983009808
        %v459 = vunpack.c.0.s8 %v458
        %v460 = vperm.slane %v456, %v459
        %v461 = vrot.slane %v449, 4
        %v462 = vsel %vm273, %v461, %v443
        %v463 = vrot.slane %v443, 4
        %v464 = vsel %vm273, %v449, %v463
        %v466 = vunpack.c.l.s4 1934713408
        %v467 = vunpack.c.0.s8 %v466
        %v468 = vperm.slane %v462, %v467
        %v470 = vunpack.c.l.s4 1934713408
        %v471 = vunpack.c.0.s8 %v470
        %v472 = vperm.slane %v464, %v471
        %v473 = vrot.slane %v460, 4
        %v474 = vsel %vm273, %v473, %v454
        %v475 = vrot.slane %v454, 4
        %v476 = vsel %vm273, %v460, %v475
        %v478 = vunpack.c.l.s4 1934713408
        %v479 = vunpack.c.0.s8 %v478
        %v480 = vperm.slane %v474, %v479
        %v482 = vunpack.c.l.s4 1934713408
        %v483 = vunpack.c.0.s8 %v482
        %v484 = vperm.slane %v476, %v483
        %v485 = vrot.slane %v480, 4
        %v486 = vsel %vm273, %v485, %v468
        %v487 = vrot.slane %v468, 4
        %v488 = vsel %vm273, %v480, %v487
        %v489 = vrot.slane %v484, 4
        %v490 = vsel %vm273, %v489, %v472
        %v491 = vrot.slane %v472, 4
        %v492 = vsel %vm273, %v484, %v491
        %495 = vrot.lane.b32.xlu0 %v434, 32
        %v496 = vpop.permute.xlu0 %495
        %497 = vrot.lane.b32.xlu0 %v488, 32
        %v498 = vpop.permute.xlu0 %497
        %503 = vrot.lane.b32.xlu0 %v436, 64
        %v504 = vpop.permute.xlu0 %503
        %505 = vrot.lane.b32.xlu0 %v490, 64
        %v506 = vpop.permute.xlu0 %505
        %511 = vrot.lane.b32.xlu0 %v438, 96
        %v512 = vpop.permute.xlu0 %511
        %513 = vrot.lane.b32.xlu0 %v492, 96
        %v514 = vpop.permute.xlu0 %513
        %vm517 = vcmask 261120
        %v518 = vsel %vm517, %v432, %v496
        %v519 = vsel %vm517, %v486, %v498
        %vm520 = vcmask 523264
        %v521 = vsel %vm520, %v518, %v504
        %v522 = vsel %vm520, %v519, %v506
        %vm523 = vcmask 785408
        %v524 = vsel %vm523, %v521, %v512
        %v525 = vsel %vm523, %v522, %v514
        %v526 = vld [vmem:[%s2] sm:$0xff]
        %v527 = vld [vmem:[%s2 + $0x8] sm:$0xff]
        %v528 = vld [vmem:[%s2 + $0x10] sm:$0xff]
        %v529 = vld [vmem:[%s2 + $0x18] sm:$0xff]
        %v531 = vsel %vm206, %v526, 0
        %v534 = vsel %vm206, %v527, 0
        %v537 = vsel %vm206, %v528, 0
        %v540 = vsel %vm206, %v529, 0
        %542 = vmatpush.msra.mxu0 0.0
        %543 = vmatpush.msra.mxu0 0.0
        %544 = vmatpush.msra.mxu0 0.0
        %545 = vmatpush.msra.mxu0 0.0
        %546 = vmatpush.msra.mxu0 0.0
        %547 = vmatpush.msra.mxu0 0.0
        %548 = vmatpush.msra.mxu0 0.0
        %549 = vmatpush.msra.mxu0 0.0
        %550 = vmatpush.msra.mxu0 0.0
        %551 = vmatpush.msra.mxu0 0.0
        %552 = vmatpush.msra.mxu0 0.0
        %553 = vmatpush.msra.mxu0 0.0
        %554 = vmatpush.msra.mxu0 0.0
        %555 = vmatpush.msra.mxu0 0.0
        %556 = vmatpush.msra.mxu0 %v525
        %557 = vmatpush.msra.mxu0 %v524
        %558 = vmatmul.f32.gmra.mxu0 %v531
        %v559 = vpop.f32.mrf.mxu0
        %v560 = vadd.f32 0.0, %v559
        %561 = vmatmul.f32.gmra.mxu0 %v534
        %v562 = vpop.f32.mrf.mxu0
        %v563 = vadd.f32 0.0, %v562
        %564 = vmatmul.f32.gmra.mxu0 %v537
        %v565 = vpop.f32.mrf.mxu0
        %v566 = vadd.f32 0.0, %v565
        %567 = vmatmul.f32.gmra.mxu0 %v540
        %v568 = vpop.f32.mrf.mxu0
        %v569 = vadd.f32 0.0, %v568
        %570 = vdwg.mxu0
        %575 = vrot.lane.b32.xlu0 %v560, 96
        %v576 = vpop.permute.xlu0 %575
        %577 = vrot.lane.b32.xlu0 %v563, 96
        %v578 = vpop.permute.xlu0 %577
        %579 = vrot.lane.b32.xlu0 %v566, 96
        %v580 = vpop.permute.xlu0 %579
        %581 = vrot.lane.b32.xlu0 %v569, 96
        %v582 = vpop.permute.xlu0 %581
        %587 = vrot.lane.b32.xlu0 %v560, 64
        %v588 = vpop.permute.xlu0 %587
        %589 = vrot.lane.b32.xlu0 %v563, 64
        %v590 = vpop.permute.xlu0 %589
        %591 = vrot.lane.b32.xlu0 %v566, 64
        %v592 = vpop.permute.xlu0 %591
        %593 = vrot.lane.b32.xlu0 %v569, 64
        %v594 = vpop.permute.xlu0 %593
        %599 = vrot.lane.b32.xlu0 %v560, 32
        %v600 = vpop.permute.xlu0 %599
        %601 = vrot.lane.b32.xlu0 %v563, 32
        %v602 = vpop.permute.xlu0 %601
        %603 = vrot.lane.b32.xlu0 %v566, 32
        %v604 = vpop.permute.xlu0 %603
        %605 = vrot.lane.b32.xlu0 %v569, 32
        %v606 = vpop.permute.xlu0 %605
        %v611 = vrot.slane %v588, 4
        %v612 = vsel %vm273, %v611, %v560
        %v613 = vrot.slane %v560, 4
        %v614 = vsel %vm273, %v588, %v613
        %v616 = vunpack.c.l.s4 1983009808
        %v617 = vunpack.c.0.s8 %v616
        %v618 = vperm.slane %v612, %v617
        %v620 = vunpack.c.l.s4 1983009808
        %v621 = vunpack.c.0.s8 %v620
        %v622 = vperm.slane %v614, %v621
        %v623 = vrot.slane %v600, 4
        %v624 = vsel %vm273, %v623, %v576
        %v625 = vrot.slane %v576, 4
        %v626 = vsel %vm273, %v600, %v625
        %v628 = vunpack.c.l.s4 1983009808
        %v629 = vunpack.c.0.s8 %v628
        %v630 = vperm.slane %v624, %v629
        %v632 = vunpack.c.l.s4 1983009808
        %v633 = vunpack.c.0.s8 %v632
        %v634 = vperm.slane %v626, %v633
        %v635 = vrot.slane %v630, 4
        %v636 = vsel %vm273, %v635, %v618
        %v637 = vrot.slane %v618, 4
        %v638 = vsel %vm273, %v630, %v637
        %v640 = vunpack.c.l.s4 1934713408
        %v641 = vunpack.c.0.s8 %v640
        %v642 = vperm.slane %v636, %v641
        %v644 = vunpack.c.l.s4 1934713408
        %v645 = vunpack.c.0.s8 %v644
        %v646 = vperm.slane %v638, %v645
        %v647 = vrot.slane %v634, 4
        %v648 = vsel %vm273, %v647, %v622
        %v649 = vrot.slane %v622, 4
        %v650 = vsel %vm273, %v634, %v649
        %v652 = vunpack.c.l.s4 1934713408
        %v653 = vunpack.c.0.s8 %v652
        %v654 = vperm.slane %v648, %v653
        %v656 = vunpack.c.l.s4 1934713408
        %v657 = vunpack.c.0.s8 %v656
        %v658 = vperm.slane %v650, %v657
        %v659 = vrot.slane %v642, 4
        %v660 = vsel %vm273, 0.0, %v659
        %v661 = vrot.slane %v646, 4
        %v662 = vsel %vm273, 0.0, %v661
        %v663 = vrot.slane %v654, 4
        %v664 = vsel %vm273, 0.0, %v663
        %v665 = vrot.slane %v658, 4
        %v666 = vsel %vm273, 0.0, %v665
        %v667 = vrot.slane %v590, 4
        %v668 = vsel %vm273, %v667, %v563
        %v669 = vrot.slane %v563, 4
        %v670 = vsel %vm273, %v590, %v669
        %v672 = vunpack.c.l.s4 1983009808
        %v673 = vunpack.c.0.s8 %v672
        %v674 = vperm.slane %v668, %v673
        %v676 = vunpack.c.l.s4 1983009808
        %v677 = vunpack.c.0.s8 %v676
        %v678 = vperm.slane %v670, %v677
        %v679 = vrot.slane %v602, 4
        %v680 = vsel %vm273, %v679, %v578
        %v681 = vrot.slane %v578, 4
        %v682 = vsel %vm273, %v602, %v681
        %v684 = vunpack.c.l.s4 1983009808
        %v685 = vunpack.c.0.s8 %v684
        %v686 = vperm.slane %v680, %v685
        %v688 = vunpack.c.l.s4 1983009808
        %v689 = vunpack.c.0.s8 %v688
        %v690 = vperm.slane %v682, %v689
        %v691 = vrot.slane %v686, 4
        %v692 = vsel %vm273, %v691, %v674
        %v693 = vrot.slane %v674, 4
        %v694 = vsel %vm273, %v686, %v693
        %v696 = vunpack.c.l.s4 1934713408
        %v697 = vunpack.c.0.s8 %v696
        %v698 = vperm.slane %v692, %v697
        %v700 = vunpack.c.l.s4 1934713408
        %v701 = vunpack.c.0.s8 %v700
        %v702 = vperm.slane %v694, %v701
        %v703 = vrot.slane %v690, 4
        %v704 = vsel %vm273, %v703, %v678
        %v705 = vrot.slane %v678, 4
        %v706 = vsel %vm273, %v690, %v705
        %v708 = vunpack.c.l.s4 1934713408
        %v709 = vunpack.c.0.s8 %v708
        %v710 = vperm.slane %v704, %v709
        %v712 = vunpack.c.l.s4 1934713408
        %v713 = vunpack.c.0.s8 %v712
        %v714 = vperm.slane %v706, %v713
        %v715 = vrot.slane %v698, 4
        %v716 = vsel %vm273, 0.0, %v715
        %v717 = vrot.slane %v702, 4
        %v718 = vsel %vm273, 0.0, %v717
        %v719 = vrot.slane %v710, 4
        %v720 = vsel %vm273, 0.0, %v719
        %v721 = vrot.slane %v714, 4
        %v722 = vsel %vm273, 0.0, %v721
        %v723 = vrot.slane %v592, 4
        %v724 = vsel %vm273, %v723, %v566
        %v725 = vrot.slane %v566, 4
        %v726 = vsel %vm273, %v592, %v725
        %v728 = vunpack.c.l.s4 1983009808
        %v729 = vunpack.c.0.s8 %v728
        %v730 = vperm.slane %v724, %v729
        %v732 = vunpack.c.l.s4 1983009808
        %v733 = vunpack.c.0.s8 %v732
        %v734 = vperm.slane %v726, %v733
        %v735 = vrot.slane %v604, 4
        %v736 = vsel %vm273, %v735, %v580
        %v737 = vrot.slane %v580, 4
        %v738 = vsel %vm273, %v604, %v737
        %v740 = vunpack.c.l.s4 1983009808
        %v741 = vunpack.c.0.s8 %v740
        %v742 = vperm.slane %v736, %v741
        %v744 = vunpack.c.l.s4 1983009808
        %v745 = vunpack.c.0.s8 %v744
        %v746 = vperm.slane %v738, %v745
        %v747 = vrot.slane %v742, 4
        %v748 = vsel %vm273, %v747, %v730
        %v749 = vrot.slane %v730, 4
        %v750 = vsel %vm273, %v742, %v749
        %v752 = vunpack.c.l.s4 1934713408
        %v753 = vunpack.c.0.s8 %v752
        %v754 = vperm.slane %v748, %v753
        %v756 = vunpack.c.l.s4 1934713408
        %v757 = vunpack.c.0.s8 %v756
        %v758 = vperm.slane %v750, %v757
        %v759 = vrot.slane %v746, 4
        %v760 = vsel %vm273, %v759, %v734
        %v761 = vrot.slane %v734, 4
        %v762 = vsel %vm273, %v746, %v761
        %v764 = vunpack.c.l.s4 1934713408
        %v765 = vunpack.c.0.s8 %v764
        %v766 = vperm.slane %v760, %v765
        %v768 = vunpack.c.l.s4 1934713408
        %v769 = vunpack.c.0.s8 %v768
        %v770 = vperm.slane %v762, %v769
        %v771 = vrot.slane %v754, 4
        %v772 = vsel %vm273, 0.0, %v771
        %v773 = vrot.slane %v758, 4
        %v774 = vsel %vm273, 0.0, %v773
        %v775 = vrot.slane %v766, 4
        %v776 = vsel %vm273, 0.0, %v775
        %v777 = vrot.slane %v770, 4
        %v778 = vsel %vm273, 0.0, %v777
        %v779 = vrot.slane %v594, 4
        %v780 = vsel %vm273, %v779, %v569
        %v781 = vrot.slane %v569, 4
        %v782 = vsel %vm273, %v594, %v781
        %v784 = vunpack.c.l.s4 1983009808
        %v785 = vunpack.c.0.s8 %v784
        %v786 = vperm.slane %v780, %v785
        %v788 = vunpack.c.l.s4 1983009808
        %v789 = vunpack.c.0.s8 %v788
        %v790 = vperm.slane %v782, %v789
        %v791 = vrot.slane %v606, 4
        %v792 = vsel %vm273, %v791, %v582
        %v793 = vrot.slane %v582, 4
        %v794 = vsel %vm273, %v606, %v793
        %v796 = vunpack.c.l.s4 1983009808
        %v797 = vunpack.c.0.s8 %v796
        %v798 = vperm.slane %v792, %v797
        %v800 = vunpack.c.l.s4 1983009808
        %v801 = vunpack.c.0.s8 %v800
        %v802 = vperm.slane %v794, %v801
        %v803 = vrot.slane %v798, 4
        %v804 = vsel %vm273, %v803, %v786
        %v805 = vrot.slane %v786, 4
        %v806 = vsel %vm273, %v798, %v805
        %v808 = vunpack.c.l.s4 1934713408
        %v809 = vunpack.c.0.s8 %v808
        %v810 = vperm.slane %v804, %v809
        %v812 = vunpack.c.l.s4 1934713408
        %v813 = vunpack.c.0.s8 %v812
        %v814 = vperm.slane %v806, %v813
        %v815 = vrot.slane %v802, 4
        %v816 = vsel %vm273, %v815, %v790
        %v817 = vrot.slane %v790, 4
        %v818 = vsel %vm273, %v802, %v817
        %v820 = vunpack.c.l.s4 1934713408
        %v821 = vunpack.c.0.s8 %v820
        %v822 = vperm.slane %v816, %v821
        %v824 = vunpack.c.l.s4 1934713408
        %v825 = vunpack.c.0.s8 %v824
        %v826 = vperm.slane %v818, %v825
        %v827 = vrot.slane %v810, 4
        %v828 = vsel %vm273, 0.0, %v827
        %v829 = vrot.slane %v814, 4
        %v830 = vsel %vm273, 0.0, %v829
        %v831 = vrot.slane %v822, 4
        %v832 = vsel %vm273, 0.0, %v831
        %v833 = vrot.slane %v826, 4
        %v834 = vsel %vm273, 0.0, %v833
        %v835 = vsel %vm273, %v661, %v642
        %v837 = vunpack.c.l.s4 1983009808
        %v838 = vunpack.c.0.s8 %v837
        %v839 = vperm.slane %v835, %v838
        %v840 = vrot.slane %v662, 4
        %v841 = vsel %vm273, %v840, %v660
        %v843 = vunpack.c.l.s4 1983009808
        %v844 = vunpack.c.0.s8 %v843
        %v845 = vperm.slane %v841, %v844
        %v846 = vsel %vm273, %v665, %v654
        %v848 = vunpack.c.l.s4 1983009808
        %v849 = vunpack.c.0.s8 %v848
        %v850 = vperm.slane %v846, %v849
        %v851 = vrot.slane %v666, 4
        %v852 = vsel %vm273, %v851, %v664
        %v854 = vunpack.c.l.s4 1983009808
        %v855 = vunpack.c.0.s8 %v854
        %v856 = vperm.slane %v852, %v855
        %v857 = vrot.slane %v845, 4
        %v858 = vsel %vm273, %v857, %v839
        %v859 = vrot.slane %v839, 4
        %v860 = vsel %vm273, %v845, %v859
        %v862 = vunpack.c.l.s4 1934713408
        %v863 = vunpack.c.0.s8 %v862
        %v864 = vperm.slane %v858, %v863
        %v866 = vunpack.c.l.s4 1934713408
        %v867 = vunpack.c.0.s8 %v866
        %v868 = vperm.slane %v860, %v867
        %v869 = vrot.slane %v856, 4
        %v870 = vsel %vm273, %v869, %v850
        %v871 = vrot.slane %v850, 4
        %v872 = vsel %vm273, %v856, %v871
        %v874 = vunpack.c.l.s4 1934713408
        %v875 = vunpack.c.0.s8 %v874
        %v876 = vperm.slane %v870, %v875
        %v878 = vunpack.c.l.s4 1934713408
        %v879 = vunpack.c.0.s8 %v878
        %v880 = vperm.slane %v872, %v879
        %v881 = vrot.slane %v876, 4
        %v882 = vsel %vm273, %v881, %v864
        %v883 = vrot.slane %v864, 4
        %v884 = vsel %vm273, %v876, %v883
        %v885 = vrot.slane %v880, 4
        %v886 = vsel %vm273, %v885, %v868
        %v887 = vrot.slane %v868, 4
        %v888 = vsel %vm273, %v880, %v887
        %v889 = vsel %vm273, %v717, %v698
        %v891 = vunpack.c.l.s4 1983009808
        %v892 = vunpack.c.0.s8 %v891
        %v893 = vperm.slane %v889, %v892
        %v894 = vrot.slane %v718, 4
        %v895 = vsel %vm273, %v894, %v716
        %v897 = vunpack.c.l.s4 1983009808
        %v898 = vunpack.c.0.s8 %v897
        %v899 = vperm.slane %v895, %v898
        %v900 = vsel %vm273, %v721, %v710
        %v902 = vunpack.c.l.s4 1983009808
        %v903 = vunpack.c.0.s8 %v902
        %v904 = vperm.slane %v900, %v903
        %v905 = vrot.slane %v722, 4
        %v906 = vsel %vm273, %v905, %v720
        %v908 = vunpack.c.l.s4 1983009808
        %v909 = vunpack.c.0.s8 %v908
        %v910 = vperm.slane %v906, %v909
        %v911 = vrot.slane %v899, 4
        %v912 = vsel %vm273, %v911, %v893
        %v913 = vrot.slane %v893, 4
        %v914 = vsel %vm273, %v899, %v913
        %v916 = vunpack.c.l.s4 1934713408
        %v917 = vunpack.c.0.s8 %v916
        %v918 = vperm.slane %v912, %v917
        %v920 = vunpack.c.l.s4 1934713408
        %v921 = vunpack.c.0.s8 %v920
        %v922 = vperm.slane %v914, %v921
        %v923 = vrot.slane %v910, 4
        %v924 = vsel %vm273, %v923, %v904
        %v925 = vrot.slane %v904, 4
        %v926 = vsel %vm273, %v910, %v925
        %v928 = vunpack.c.l.s4 1934713408
        %v929 = vunpack.c.0.s8 %v928
        %v930 = vperm.slane %v924, %v929
        %v932 = vunpack.c.l.s4 1934713408
        %v933 = vunpack.c.0.s8 %v932
        %v934 = vperm.slane %v926, %v933
        %v935 = vrot.slane %v930, 4
        %v936 = vsel %vm273, %v935, %v918
        %v937 = vrot.slane %v918, 4
        %v938 = vsel %vm273, %v930, %v937
        %v939 = vrot.slane %v934, 4
        %v940 = vsel %vm273, %v939, %v922
        %v941 = vrot.slane %v922, 4
        %v942 = vsel %vm273, %v934, %v941
        %v943 = vsel %vm273, %v773, %v754
        %v945 = vunpack.c.l.s4 1983009808
        %v946 = vunpack.c.0.s8 %v945
        %v947 = vperm.slane %v943, %v946
        %v948 = vrot.slane %v774, 4
        %v949 = vsel %vm273, %v948, %v772
        %v951 = vunpack.c.l.s4 1983009808
        %v952 = vunpack.c.0.s8 %v951
        %v953 = vperm.slane %v949, %v952
        %v954 = vsel %vm273, %v777, %v766
        %v956 = vunpack.c.l.s4 1983009808
        %v957 = vunpack.c.0.s8 %v956
        %v958 = vperm.slane %v954, %v957
        %v959 = vrot.slane %v778, 4
        %v960 = vsel %vm273, %v959, %v776
        %v962 = vunpack.c.l.s4 1983009808
        %v963 = vunpack.c.0.s8 %v962
        %v964 = vperm.slane %v960, %v963
        %v965 = vrot.slane %v953, 4
        %v966 = vsel %vm273, %v965, %v947
        %v967 = vrot.slane %v947, 4
        %v968 = vsel %vm273, %v953, %v967
        %v970 = vunpack.c.l.s4 1934713408
        %v971 = vunpack.c.0.s8 %v970
        %v972 = vperm.slane %v966, %v971
        %v974 = vunpack.c.l.s4 1934713408
        %v975 = vunpack.c.0.s8 %v974
        %v976 = vperm.slane %v968, %v975
        %v977 = vrot.slane %v964, 4
        %v978 = vsel %vm273, %v977, %v958
        %v979 = vrot.slane %v958, 4
        %v980 = vsel %vm273, %v964, %v979
        %v982 = vunpack.c.l.s4 1934713408
        %v983 = vunpack.c.0.s8 %v982
        %v984 = vperm.slane %v978, %v983
        %v986 = vunpack.c.l.s4 1934713408
        %v987 = vunpack.c.0.s8 %v986
        %v988 = vperm.slane %v980, %v987
        %v989 = vrot.slane %v984, 4
        %v990 = vsel %vm273, %v989, %v972
        %v991 = vrot.slane %v972, 4
        %v992 = vsel %vm273, %v984, %v991
        %v993 = vrot.slane %v988, 4
        %v994 = vsel %vm273, %v993, %v976
        %v995 = vrot.slane %v976, 4
        %v996 = vsel %vm273, %v988, %v995
        %v997 = vsel %vm273, %v829, %v810
        %v999 = vunpack.c.l.s4 1983009808
        %v1000 = vunpack.c.0.s8 %v999
        %v1001 = vperm.slane %v997, %v1000
        %v1002 = vrot.slane %v830, 4
        %v1003 = vsel %vm273, %v1002, %v828
        %v1005 = vunpack.c.l.s4 1983009808
        %v1006 = vunpack.c.0.s8 %v1005
        %v1007 = vperm.slane %v1003, %v1006
        %v1008 = vsel %vm273, %v833, %v822
        %v1010 = vunpack.c.l.s4 1983009808
        %v1011 = vunpack.c.0.s8 %v1010
        %v1012 = vperm.slane %v1008, %v1011
        %v1013 = vrot.slane %v834, 4
        %v1014 = vsel %vm273, %v1013, %v832
        %v1016 = vunpack.c.l.s4 1983009808
        %v1017 = vunpack.c.0.s8 %v1016
        %v1018 = vperm.slane %v1014, %v1017
        %v1019 = vrot.slane %v1007, 4
        %v1020 = vsel %vm273, %v1019, %v1001
        %v1021 = vrot.slane %v1001, 4
        %v1022 = vsel %vm273, %v1007, %v1021
        %v1024 = vunpack.c.l.s4 1934713408
        %v1025 = vunpack.c.0.s8 %v1024
        %v1026 = vperm.slane %v1020, %v1025
        %v1028 = vunpack.c.l.s4 1934713408
        %v1029 = vunpack.c.0.s8 %v1028
        %v1030 = vperm.slane %v1022, %v1029
        %v1031 = vrot.slane %v1018, 4
        %v1032 = vsel %vm273, %v1031, %v1012
        %v1033 = vrot.slane %v1012, 4
        %v1034 = vsel %vm273, %v1018, %v1033
        %v1036 = vunpack.c.l.s4 1934713408
        %v1037 = vunpack.c.0.s8 %v1036
        %v1038 = vperm.slane %v1032, %v1037
        %v1040 = vunpack.c.l.s4 1934713408
        %v1041 = vunpack.c.0.s8 %v1040
        %v1042 = vperm.slane %v1034, %v1041
        %v1043 = vrot.slane %v1038, 4
        %v1044 = vsel %vm273, %v1043, %v1026
        %v1045 = vrot.slane %v1026, 4
        %v1046 = vsel %vm273, %v1038, %v1045
        %v1047 = vrot.slane %v1042, 4
        %v1048 = vsel %vm273, %v1047, %v1030
        %v1049 = vrot.slane %v1030, 4
        %v1050 = vsel %vm273, %v1042, %v1049
        %v1051 = vrot.slane %v886, 4
        %v1052 = vsel %vm273, %v1051, %v882
        %v1053 = vrot.slane %v882, 4
        %v1054 = vsel %vm273, %v886, %v1053
        %v1056 = vunpack.c.l.s4 1983009808
        %v1057 = vunpack.c.0.s8 %v1056
        %v1058 = vperm.slane %v1052, %v1057
        %v1060 = vunpack.c.l.s4 1983009808
        %v1061 = vunpack.c.0.s8 %v1060
        %v1062 = vperm.slane %v1054, %v1061
        %v1063 = vrot.slane %v888, 4
        %v1064 = vsel %vm273, %v1063, %v884
        %v1065 = vrot.slane %v884, 4
        %v1066 = vsel %vm273, %v888, %v1065
        %v1068 = vunpack.c.l.s4 1983009808
        %v1069 = vunpack.c.0.s8 %v1068
        %v1070 = vperm.slane %v1064, %v1069
        %v1072 = vunpack.c.l.s4 1983009808
        %v1073 = vunpack.c.0.s8 %v1072
        %v1074 = vperm.slane %v1066, %v1073
        %v1075 = vrot.slane %v1070, 4
        %v1076 = vsel %vm273, %v1075, %v1058
        %v1077 = vrot.slane %v1058, 4
        %v1078 = vsel %vm273, %v1070, %v1077
        %v1080 = vunpack.c.l.s4 1934713408
        %v1081 = vunpack.c.0.s8 %v1080
        %v1082 = vperm.slane %v1076, %v1081
        %v1084 = vunpack.c.l.s4 1934713408
        %v1085 = vunpack.c.0.s8 %v1084
        %v1086 = vperm.slane %v1078, %v1085
        %v1087 = vrot.slane %v1074, 4
        %v1088 = vsel %vm273, %v1087, %v1062
        %v1089 = vrot.slane %v1062, 4
        %v1090 = vsel %vm273, %v1074, %v1089
        %v1092 = vunpack.c.l.s4 1934713408
        %v1093 = vunpack.c.0.s8 %v1092
        %v1094 = vperm.slane %v1088, %v1093
        %v1096 = vunpack.c.l.s4 1934713408
        %v1097 = vunpack.c.0.s8 %v1096
        %v1098 = vperm.slane %v1090, %v1097
        %v1099 = vrot.slane %v1082, 4
        %v1100 = vsel %vm273, 0.0, %v1099
        %v1101 = vrot.slane %v1086, 4
        %v1102 = vsel %vm273, 0.0, %v1101
        %v1103 = vrot.slane %v1094, 4
        %v1104 = vsel %vm273, 0.0, %v1103
        %v1105 = vrot.slane %v1098, 4
        %v1106 = vsel %vm273, 0.0, %v1105
        %v1107 = vrot.slane %v940, 4
        %v1108 = vsel %vm273, %v1107, %v936
        %v1109 = vrot.slane %v936, 4
        %v1110 = vsel %vm273, %v940, %v1109
        %v1112 = vunpack.c.l.s4 1983009808
        %v1113 = vunpack.c.0.s8 %v1112
        %v1114 = vperm.slane %v1108, %v1113
        %v1116 = vunpack.c.l.s4 1983009808
        %v1117 = vunpack.c.0.s8 %v1116
        %v1118 = vperm.slane %v1110, %v1117
        %v1119 = vrot.slane %v942, 4
        %v1120 = vsel %vm273, %v1119, %v938
        %v1121 = vrot.slane %v938, 4
        %v1122 = vsel %vm273, %v942, %v1121
        %v1124 = vunpack.c.l.s4 1983009808
        %v1125 = vunpack.c.0.s8 %v1124
        %v1126 = vperm.slane %v1120, %v1125
        %v1128 = vunpack.c.l.s4 1983009808
        %v1129 = vunpack.c.0.s8 %v1128
        %v1130 = vperm.slane %v1122, %v1129
        %v1131 = vrot.slane %v1126, 4
        %v1132 = vsel %vm273, %v1131, %v1114
        %v1133 = vrot.slane %v1114, 4
        %v1134 = vsel %vm273, %v1126, %v1133
        %v1136 = vunpack.c.l.s4 1934713408
        %v1137 = vunpack.c.0.s8 %v1136
        %v1138 = vperm.slane %v1132, %v1137
        %v1140 = vunpack.c.l.s4 1934713408
        %v1141 = vunpack.c.0.s8 %v1140
        %v1142 = vperm.slane %v1134, %v1141
        %v1143 = vrot.slane %v1130, 4
        %v1144 = vsel %vm273, %v1143, %v1118
        %v1145 = vrot.slane %v1118, 4
        %v1146 = vsel %vm273, %v1130, %v1145
        %v1148 = vunpack.c.l.s4 1934713408
        %v1149 = vunpack.c.0.s8 %v1148
        %v1150 = vperm.slane %v1144, %v1149
        %v1152 = vunpack.c.l.s4 1934713408
        %v1153 = vunpack.c.0.s8 %v1152
        %v1154 = vperm.slane %v1146, %v1153
        %v1155 = vrot.slane %v1138, 4
        %v1156 = vsel %vm273, 0.0, %v1155
        %v1157 = vrot.slane %v1142, 4
        %v1158 = vsel %vm273, 0.0, %v1157
        %v1159 = vrot.slane %v1150, 4
        %v1160 = vsel %vm273, 0.0, %v1159
        %v1161 = vrot.slane %v1154, 4
        %v1162 = vsel %vm273, 0.0, %v1161
        %v1163 = vrot.slane %v994, 4
        %v1164 = vsel %vm273, %v1163, %v990
        %v1165 = vrot.slane %v990, 4
        %v1166 = vsel %vm273, %v994, %v1165
        %v1168 = vunpack.c.l.s4 1983009808
        %v1169 = vunpack.c.0.s8 %v1168
        %v1170 = vperm.slane %v1164, %v1169
        %v1172 = vunpack.c.l.s4 1983009808
        %v1173 = vunpack.c.0.s8 %v1172
        %v1174 = vperm.slane %v1166, %v1173
        %v1175 = vrot.slane %v996, 4
        %v1176 = vsel %vm273, %v1175, %v992
        %v1177 = vrot.slane %v992, 4
        %v1178 = vsel %vm273, %v996, %v1177
        %v1180 = vunpack.c.l.s4 1983009808
        %v1181 = vunpack.c.0.s8 %v1180
        %v1182 = vperm.slane %v1176, %v1181
        %v1184 = vunpack.c.l.s4 1983009808
        %v1185 = vunpack.c.0.s8 %v1184
        %v1186 = vperm.slane %v1178, %v1185
        %v1187 = vrot.slane %v1182, 4
        %v1188 = vsel %vm273, %v1187, %v1170
        %v1189 = vrot.slane %v1170, 4
        %v1190 = vsel %vm273, %v1182, %v1189
        %v1192 = vunpack.c.l.s4 1934713408
        %v1193 = vunpack.c.0.s8 %v1192
        %v1194 = vperm.slane %v1188, %v1193
        %v1196 = vunpack.c.l.s4 1934713408
        %v1197 = vunpack.c.0.s8 %v1196
        %v1198 = vperm.slane %v1190, %v1197
        %v1199 = vrot.slane %v1186, 4
        %v1200 = vsel %vm273, %v1199, %v1174
        %v1201 = vrot.slane %v1174, 4
        %v1202 = vsel %vm273, %v1186, %v1201
        %v1204 = vunpack.c.l.s4 1934713408
        %v1205 = vunpack.c.0.s8 %v1204
        %v1206 = vperm.slane %v1200, %v1205
        %v1208 = vunpack.c.l.s4 1934713408
        %v1209 = vunpack.c.0.s8 %v1208
        %v1210 = vperm.slane %v1202, %v1209
        %v1211 = vrot.slane %v1194, 4
        %v1212 = vsel %vm273, 0.0, %v1211
        %v1213 = vrot.slane %v1198, 4
        %v1214 = vsel %vm273, 0.0, %v1213
        %v1215 = vrot.slane %v1206, 4
        %v1216 = vsel %vm273, 0.0, %v1215
        %v1217 = vrot.slane %v1210, 4
        %v1218 = vsel %vm273, 0.0, %v1217
        %v1219 = vrot.slane %v1048, 4
        %v1220 = vsel %vm273, %v1219, %v1044
        %v1221 = vrot.slane %v1044, 4
        %v1222 = vsel %vm273, %v1048, %v1221
        %v1224 = vunpack.c.l.s4 1983009808
        %v1225 = vunpack.c.0.s8 %v1224
        %v1226 = vperm.slane %v1220, %v1225
        %v1228 = vunpack.c.l.s4 1983009808
        %v1229 = vunpack.c.0.s8 %v1228
        %v1230 = vperm.slane %v1222, %v1229
        %v1231 = vrot.slane %v1050, 4
        %v1232 = vsel %vm273, %v1231, %v1046
        %v1233 = vrot.slane %v1046, 4
        %v1234 = vsel %vm273, %v1050, %v1233
        %v1236 = vunpack.c.l.s4 1983009808
        %v1237 = vunpack.c.0.s8 %v1236
        %v1238 = vperm.slane %v1232, %v1237
        %v1240 = vunpack.c.l.s4 1983009808
        %v1241 = vunpack.c.0.s8 %v1240
        %v1242 = vperm.slane %v1234, %v1241
        %v1243 = vrot.slane %v1238, 4
        %v1244 = vsel %vm273, %v1243, %v1226
        %v1245 = vrot.slane %v1226, 4
        %v1246 = vsel %vm273, %v1238, %v1245
        %v1248 = vunpack.c.l.s4 1934713408
        %v1249 = vunpack.c.0.s8 %v1248
        %v1250 = vperm.slane %v1244, %v1249
        %v1252 = vunpack.c.l.s4 1934713408
        %v1253 = vunpack.c.0.s8 %v1252
        %v1254 = vperm.slane %v1246, %v1253
        %v1255 = vrot.slane %v1242, 4
        %v1256 = vsel %vm273, %v1255, %v1230
        %v1257 = vrot.slane %v1230, 4
        %v1258 = vsel %vm273, %v1242, %v1257
        %v1260 = vunpack.c.l.s4 1934713408
        %v1261 = vunpack.c.0.s8 %v1260
        %v1262 = vperm.slane %v1256, %v1261
        %v1264 = vunpack.c.l.s4 1934713408
        %v1265 = vunpack.c.0.s8 %v1264
        %v1266 = vperm.slane %v1258, %v1265
        %v1267 = vrot.slane %v1250, 4
        %v1268 = vsel %vm273, 0.0, %v1267
        %v1269 = vrot.slane %v1254, 4
        %v1270 = vsel %vm273, 0.0, %v1269
        %v1271 = vrot.slane %v1262, 4
        %v1272 = vsel %vm273, 0.0, %v1271
        %v1273 = vrot.slane %v1266, 4
        %v1274 = vsel %vm273, 0.0, %v1273
        %1276 = vrot.lane.b32.xlu0 %v1100, 32
        %v1277 = vpop.permute.xlu0 %1276
        %1280 = vrot.lane.b32.xlu0 %v1086, 64
        %v1281 = vpop.permute.xlu0 %1280
        %1284 = vrot.lane.b32.xlu0 %v1102, 96
        %v1285 = vpop.permute.xlu0 %1284
        %1288 = vrot.lane.b32.xlu0 %v1104, 32
        %v1289 = vpop.permute.xlu0 %1288
        %1292 = vrot.lane.b32.xlu0 %v1098, 64
        %v1293 = vpop.permute.xlu0 %1292
        %1296 = vrot.lane.b32.xlu0 %v1106, 96
        %v1297 = vpop.permute.xlu0 %1296
        %1300 = vrot.lane.b32.xlu0 %v1156, 32
        %v1301 = vpop.permute.xlu0 %1300
        %1304 = vrot.lane.b32.xlu0 %v1142, 64
        %v1305 = vpop.permute.xlu0 %1304
        %1308 = vrot.lane.b32.xlu0 %v1158, 96
        %v1309 = vpop.permute.xlu0 %1308
        %1312 = vrot.lane.b32.xlu0 %v1160, 32
        %v1313 = vpop.permute.xlu0 %1312
        %1316 = vrot.lane.b32.xlu0 %v1154, 64
        %v1317 = vpop.permute.xlu0 %1316
        %1320 = vrot.lane.b32.xlu0 %v1162, 96
        %v1321 = vpop.permute.xlu0 %1320
        %1324 = vrot.lane.b32.xlu0 %v1212, 32
        %v1325 = vpop.permute.xlu0 %1324
        %1328 = vrot.lane.b32.xlu0 %v1198, 64
        %v1329 = vpop.permute.xlu0 %1328
        %1332 = vrot.lane.b32.xlu0 %v1214, 96
        %v1333 = vpop.permute.xlu0 %1332
        %1336 = vrot.lane.b32.xlu0 %v1216, 32
        %v1337 = vpop.permute.xlu0 %1336
        %1340 = vrot.lane.b32.xlu0 %v1210, 64
        %v1341 = vpop.permute.xlu0 %1340
        %1344 = vrot.lane.b32.xlu0 %v1218, 96
        %v1345 = vpop.permute.xlu0 %1344
        %1348 = vrot.lane.b32.xlu0 %v1268, 32
        %v1349 = vpop.permute.xlu0 %1348
        %1352 = vrot.lane.b32.xlu0 %v1254, 64
        %v1353 = vpop.permute.xlu0 %1352
        %1356 = vrot.lane.b32.xlu0 %v1270, 96
        %v1357 = vpop.permute.xlu0 %1356
        %1360 = vrot.lane.b32.xlu0 %v1272, 32
        %v1361 = vpop.permute.xlu0 %1360
        %1364 = vrot.lane.b32.xlu0 %v1266, 64
        %v1365 = vpop.permute.xlu0 %1364
        %1368 = vrot.lane.b32.xlu0 %v1274, 96
        %v1369 = vpop.permute.xlu0 %1368
        %v1371 = vsel %vm517, %v1082, %v1277
        %v1372 = vsel %vm520, %v1371, %v1281
        %v1373 = vsel %vm523, %v1372, %v1285
        %v1374 = vsel %vm517, %v1094, %v1289
        %v1375 = vsel %vm520, %v1374, %v1293
        %v1376 = vsel %vm523, %v1375, %v1297
        %v1377 = vsel %vm517, %v1138, %v1301
        %v1378 = vsel %vm520, %v1377, %v1305
        %v1379 = vsel %vm523, %v1378, %v1309
        %v1380 = vsel %vm517, %v1150, %v1313
        %v1381 = vsel %vm520, %v1380, %v1317
        %v1382 = vsel %vm523, %v1381, %v1321
        %v1383 = vsel %vm517, %v1194, %v1325
        %v1384 = vsel %vm520, %v1383, %v1329
        %v1385 = vsel %vm523, %v1384, %v1333
        %v1386 = vsel %vm517, %v1206, %v1337
        %v1387 = vsel %vm520, %v1386, %v1341
        %v1388 = vsel %vm523, %v1387, %v1345
        %v1389 = vsel %vm517, %v1250, %v1349
        %v1390 = vsel %vm520, %v1389, %v1353
        %v1391 = vsel %vm523, %v1390, %v1357
        %v1392 = vsel %vm517, %v1262, %v1361
        %v1393 = vsel %vm520, %v1392, %v1365
        %v1394 = vsel %vm523, %v1393, %v1369
        %v1395 = vld [vmem:[%s3] sm:$0xff]
        %vm1396 = vcmask 31744
        %v1398 = vsel %vm1396, %v1395, 0
        %vm1400 = vcmask 1043456
        %v1402 = vsel %vm1400, %v1373, 0
        %v1405 = vsel %vm1400, %v1376, 0
        %v1408 = vsel %vm1400, %v1379, 0
        %v1411 = vsel %vm1400, %v1382, 0
        %v1414 = vsel %vm1400, %v1385, 0
        %v1417 = vsel %vm1400, %v1388, 0
        %v1420 = vsel %vm1400, %v1391, 0
        %v1423 = vsel %vm1400, %v1394, 0
        %1425 = vmatpush.msra.mxu0 0.0
        %1426 = vmatpush.msra.mxu0 0.0
        %1427 = vmatpush.msra.mxu0 0.0
        %1428 = vmatpush.msra.mxu0 0.0
        %1429 = vmatpush.msra.mxu0 0.0
        %1430 = vmatpush.msra.mxu0 0.0
        %1431 = vmatpush.msra.mxu0 0.0
        %1432 = vmatpush.msra.mxu0 0.0
        %1433 = vmatpush.msra.mxu0 0.0
        %1434 = vmatpush.msra.mxu0 0.0
        %1435 = vmatpush.msra.mxu0 0.0
        %1436 = vmatpush.msra.mxu0 0.0
        %1437 = vmatpush.msra.mxu0 0.0
        %1438 = vmatpush.msra.mxu0 0.0
        %1439 = vmatpush.msra.mxu0 0.0
        %1440 = vmatpush.msra.mxu0 %v1402
        %1441 = vmatmul.f32.gmra.mxu0 %v1398
        %v1442 = vpop.f32.mrf.mxu0
        %v1443 = vadd.f32 0.0, %v1442
        %1444 = vdwg.mxu0
        %1445 = vmatpush.msra.mxu0 0.0
        %1446 = vmatpush.msra.mxu0 0.0
        %1447 = vmatpush.msra.mxu0 0.0
        %1448 = vmatpush.msra.mxu0 0.0
        %1449 = vmatpush.msra.mxu0 0.0
        %1450 = vmatpush.msra.mxu0 0.0
        %1451 = vmatpush.msra.mxu0 0.0
        %1452 = vmatpush.msra.mxu0 0.0
        %1453 = vmatpush.msra.mxu0 0.0
        %1454 = vmatpush.msra.mxu0 0.0
        %1455 = vmatpush.msra.mxu0 0.0
        %1456 = vmatpush.msra.mxu0 0.0
        %1457 = vmatpush.msra.mxu0 0.0
        %1458 = vmatpush.msra.mxu0 0.0
        %1459 = vmatpush.msra.mxu0 0.0
        %1460 = vmatpush.msra.mxu0 %v1405
        %1461 = vmatmul.f32.gmra.mxu0 %v1398
        %v1462 = vpop.f32.mrf.mxu0
        %v1463 = vadd.f32 0.0, %v1462
        %1464 = vdwg.mxu0
        %1465 = vmatpush.msra.mxu0 0.0
        %1466 = vmatpush.msra.mxu0 0.0
        %1467 = vmatpush.msra.mxu0 0.0
        %1468 = vmatpush.msra.mxu0 0.0
        %1469 = vmatpush.msra.mxu0 0.0
        %1470 = vmatpush.msra.mxu0 0.0
        %1471 = vmatpush.msra.mxu0 0.0
        %1472 = vmatpush.msra.mxu0 0.0
        %1473 = vmatpush.msra.mxu0 0.0
        %1474 = vmatpush.msra.mxu0 0.0
        %1475 = vmatpush.msra.mxu0 0.0
        %1476 = vmatpush.msra.mxu0 0.0
        %1477 = vmatpush.msra.mxu0 0.0
        %1478 = vmatpush.msra.mxu0 0.0
        %1479 = vmatpush.msra.mxu0 0.0
        %1480 = vmatpush.msra.mxu0 %v1408
        %1481 = vmatmul.f32.gmra.mxu0 %v1398
        %v1482 = vpop.f32.mrf.mxu0
        %v1483 = vadd.f32 0.0, %v1482
        %1484 = vdwg.mxu0
        %1485 = vmatpush.msra.mxu0 0.0
        %1486 = vmatpush.msra.mxu0 0.0
        %1487 = vmatpush.msra.mxu0 0.0
        %1488 = vmatpush.msra.mxu0 0.0
        %1489 = vmatpush.msra.mxu0 0.0
        %1490 = vmatpush.msra.mxu0 0.0
        %1491 = vmatpush.msra.mxu0 0.0
        %1492 = vmatpush.msra.mxu0 0.0
        %1493 = vmatpush.msra.mxu0 0.0
        %1494 = vmatpush.msra.mxu0 0.0
        %1495 = vmatpush.msra.mxu0 0.0
        %1496 = vmatpush.msra.mxu0 0.0
        %1497 = vmatpush.msra.mxu0 0.0
        %1498 = vmatpush.msra.mxu0 0.0
        %1499 = vmatpush.msra.mxu0 0.0
        %1500 = vmatpush.msra.mxu0 %v1411
        %1501 = vmatmul.f32.gmra.mxu0 %v1398
        %v1502 = vpop.f32.mrf.mxu0
        %v1503 = vadd.f32 0.0, %v1502
        %1504 = vdwg.mxu0
        %1505 = vmatpush.msra.mxu0 0.0
        %1506 = vmatpush.msra.mxu0 0.0
        %1507 = vmatpush.msra.mxu0 0.0
        %1508 = vmatpush.msra.mxu0 0.0
        %1509 = vmatpush.msra.mxu0 0.0
        %1510 = vmatpush.msra.mxu0 0.0
        %1511 = vmatpush.msra.mxu0 0.0
        %1512 = vmatpush.msra.mxu0 0.0
        %1513 = vmatpush.msra.mxu0 0.0
        %1514 = vmatpush.msra.mxu0 0.0
        %1515 = vmatpush.msra.mxu0 0.0
        %1516 = vmatpush.msra.mxu0 0.0
        %1517 = vmatpush.msra.mxu0 0.0
        %1518 = vmatpush.msra.mxu0 0.0
        %1519 = vmatpush.msra.mxu0 0.0
        %1520 = vmatpush.msra.mxu0 %v1414
        %1521 = vmatmul.f32.gmra.mxu0 %v1398
        %v1522 = vpop.f32.mrf.mxu0
        %v1523 = vadd.f32 0.0, %v1522
        %1524 = vdwg.mxu0
        %1525 = vmatpush.msra.mxu0 0.0
        %1526 = vmatpush.msra.mxu0 0.0
        %1527 = vmatpush.msra.mxu0 0.0
        %1528 = vmatpush.msra.mxu0 0.0
        %1529 = vmatpush.msra.mxu0 0.0
        %1530 = vmatpush.msra.mxu0 0.0
        %1531 = vmatpush.msra.mxu0 0.0
        %1532 = vmatpush.msra.mxu0 0.0
        %1533 = vmatpush.msra.mxu0 0.0
        %1534 = vmatpush.msra.mxu0 0.0
        %1535 = vmatpush.msra.mxu0 0.0
        %1536 = vmatpush.msra.mxu0 0.0
        %1537 = vmatpush.msra.mxu0 0.0
        %1538 = vmatpush.msra.mxu0 0.0
        %1539 = vmatpush.msra.mxu0 0.0
        %1540 = vmatpush.msra.mxu0 %v1417
        %1541 = vmatmul.f32.gmra.mxu0 %v1398
        %v1542 = vpop.f32.mrf.mxu0
        %v1543 = vadd.f32 0.0, %v1542
        %1544 = vdwg.mxu0
        %1545 = vmatpush.msra.mxu0 0.0
        %1546 = vmatpush.msra.mxu0 0.0
        %1547 = vmatpush.msra.mxu0 0.0
        %1548 = vmatpush.msra.mxu0 0.0
        %1549 = vmatpush.msra.mxu0 0.0
        %1550 = vmatpush.msra.mxu0 0.0
        %1551 = vmatpush.msra.mxu0 0.0
        %1552 = vmatpush.msra.mxu0 0.0
        %1553 = vmatpush.msra.mxu0 0.0
        %1554 = vmatpush.msra.mxu0 0.0
        %1555 = vmatpush.msra.mxu0 0.0
        %1556 = vmatpush.msra.mxu0 0.0
        %1557 = vmatpush.msra.mxu0 0.0
        %1558 = vmatpush.msra.mxu0 0.0
        %1559 = vmatpush.msra.mxu0 0.0
        %1560 = vmatpush.msra.mxu0 %v1420
        %1561 = vmatmul.f32.gmra.mxu0 %v1398
        %v1562 = vpop.f32.mrf.mxu0
        %v1563 = vadd.f32 0.0, %v1562
        %1564 = vdwg.mxu0
        %1565 = vmatpush.msra.mxu0 0.0
        %1566 = vmatpush.msra.mxu0 0.0
        %1567 = vmatpush.msra.mxu0 0.0
        %1568 = vmatpush.msra.mxu0 0.0
        %1569 = vmatpush.msra.mxu0 0.0
        %1570 = vmatpush.msra.mxu0 0.0
        %1571 = vmatpush.msra.mxu0 0.0
        %1572 = vmatpush.msra.mxu0 0.0
        %1573 = vmatpush.msra.mxu0 0.0
        %1574 = vmatpush.msra.mxu0 0.0
        %1575 = vmatpush.msra.mxu0 0.0
        %1576 = vmatpush.msra.mxu0 0.0
        %1577 = vmatpush.msra.mxu0 0.0
        %1578 = vmatpush.msra.mxu0 0.0
        %1579 = vmatpush.msra.mxu0 0.0
        %1580 = vmatpush.msra.mxu0 %v1423
        %1581 = vmatmul.f32.gmra.mxu0 %v1398
        %v1582 = vpop.f32.mrf.mxu0
        %v1583 = vadd.f32 0.0, %v1582
        %1584 = vdwg.mxu0
        %v1585 = vmax.f32 %v1443, 0.0
        %v1586 = vmax.f32 %v1463, 0.0
        %v1587 = vmax.f32 %v1483, 0.0
        %v1588 = vmax.f32 %v1503, 0.0
        %v1589 = vmax.f32 %v1523, 0.0
        %v1590 = vmax.f32 %v1543, 0.0
        %v1591 = vmax.f32 %v1563, 0.0
        %v1592 = vmax.f32 %v1583, 0.0
        %1593 = vst [vmem:[%s190] sm:$0xff] %v1585
        %1594 = vst [vmem:[%s190 + $0x8] sm:$0xff] %v1586
        %1595 = vst [vmem:[%s190 + $0x10] sm:$0xff] %v1587
        %1596 = vst [vmem:[%s190 + $0x18] sm:$0xff] %v1588
        %1597 = vst [vmem:[%s190 + $0x20] sm:$0xff] %v1589
        %1598 = vst [vmem:[%s190 + $0x28] sm:$0xff] %v1590
        %1599 = vst [vmem:[%s190 + $0x30] sm:$0xff] %v1591
        %1600 = vst [vmem:[%s190 + $0x38] sm:$0xff] %v1592
        %s1601 = sand.u32 %s115, 1
        %s1602 = scalar_lea.sflag [#allocation3], %s1601
        %s1603 = sand.u32 %s115, 1
        %s1604 = smul.addr %s1603, 64
        %s1605 = scalar_lea.vmem [#allocation2], %s1604
        // Predicated region
        $region37: #{tpu_custom_call.1} parent=35 // pred_check
          %p1606 = pneg %p125
        $region38: #{tpu_custom_call.1} parent=35 // pred_check_branch
          %1608 = sbr.rel (%p1606) target = $region40
        $region39: #{tpu_custom_call.1} parent=35 // pred_region
          %1610 = vsyncadd %s1602, 0
          %s1611 = smul.addr %s18, 8
          %s1612 = smul.addr %s1611, 8
          %s1613 = scalar_lea.hbm %s4, %s1612
          %s1615 = sshll.u32 %s1605, 4
          %s1616 = int_to_ptr.vmem [resolvable:$true] %s1615
          %s1617 = sshll.u32 %s1613, 4
          %s1618 = int_to_ptr.hbm [resolvable:$true] %s1617
          %1620 = dma.vmem_to_hbm [thread:$0]  %s1616, 1024, %s1618, %s1602
        $region40: #{tpu_custom_call.1} parent=35 // pred_fallthru
          _
      $region36: #{tpu_custom_call.1} parent=5 // pred_fallthru
        _
      %p1621 = scmp.le.s32.totalorder 2, %s13
      // Predicated region
      $region41: #{tpu_custom_call.1} parent=5 // pred_check
        %p1622 = pneg %p1621
      $region42: #{tpu_custom_call.1} parent=5 // pred_check_branch
        %1624 = sbr.rel (%p1622) target = $region44
      $region43: #{tpu_custom_call.1} parent=5 // pred_region
        %s1625 = ssub.s32 %s13, 2
        // Predicated region
        $region45: #{tpu_custom_call.1} parent=43 // pred_check
          %p1626 = pneg %p131
        $region46: #{tpu_custom_call.1} parent=43 // pred_check_branch
          %1628 = sbr.rel (%p1626) target = $region48
        $region47: #{tpu_custom_call.1} parent=43 // pred_region
          %s1629 = sand.u32 %s116, 1
          %s1630 = scalar_lea.sflag [#allocation3], %s1629
          %s1631 = sand.u32 %s116, 1
          %s1632 = smul.addr %s1631, 64
          %s1633 = scalar_lea.vmem [#allocation2], %s1632
          %1635 = dma.done %s1630, 1024
        $region48: #{tpu_custom_call.1} parent=43 // pred_fallthru
          _
      $region44: #{tpu_custom_call.1} parent=5 // pred_fallthru
        _
    $region6: #{tpu_custom_call.1} parent=1 // loop_footer
      %s17 = sadd.s32 1, %s13
    $region7: #{tpu_custom_call.1} parent=1 // loop_footer_branch
      %12 = sbr.rel target = $region3
    $region8: #{tpu_custom_call.1} parent=1 // loop_exit
      _
    %1636 = vsyncpa [#allocation3], 1
    %s1637 = scalar_lea.sflag [#allocation3], 1
    %1638 = vsyncpa %s1637, 1

</llo_original>
